<compile_context>
chip_gen: v5e
topology: v5e:2x2
jax: 0.10.0
libtpu: 0.0.40
codegen_flags: <defaults>
</compile_context>

<pallas_src>
import jax
import jax.numpy as jnp
from jax import lax
from jax.experimental import pallas as pl
from jax.experimental.pallas import tpu as pltpu

LANES = 128        # lane width (fixed by hardware vreg layout)
TILE_ROWS = 1024   # rows of the (rows, 128) slab per grid step (512 KiB f32 block)


# ---------------------------------------------------------------------------
# Kernel factories (all shape/variant decisions are trace-time Python consts).
# ---------------------------------------------------------------------------

def _make_reduce_kernel(valid_rows, tile_rows, need_mask, has_weight):
    """Reduction-only kernel: per-program partial sum of |pred - target| * w."""

    def _loss(pred, tgt, w):
        loss = jnp.abs(pred.astype(jnp.float32) - tgt.astype(jnp.float32))
        if w is not None:
            loss = loss * w.astype(jnp.float32)
        if need_mask:
            # Final grid block may extend past the array; OOB rows hold garbage.
            row0 = pl.program_id(0) * tile_rows
            rid = row0 + lax.broadcasted_iota(jnp.int32, loss.shape, 0)
            loss = jnp.where(rid < valid_rows, loss, 0.0)
        # Collapse sublanes once per (large) block; per-program partial keeps the
        # grid free of cross-step state (megacore-parallel friendly).
        return jnp.sum(loss, axis=0, keepdims=True)

    if has_weight:
        def kernel(pred_ref, tgt_ref, w_ref, part_ref):
            part_ref[...] = _loss(pred_ref[...], tgt_ref[...],
                                  w_ref[...]).reshape(part_ref.shape)
    else:
        def kernel(pred_ref, tgt_ref, part_ref):
            part_ref[...] = _loss(pred_ref[...], tgt_ref[...],
                                  None).reshape(part_ref.shape)
    return kernel


def _make_elementwise_kernel(has_weight):
    """Elementwise kernel for reduction='none' (no sum needed)."""

    def _loss(pred, tgt, w, out_dtype):
        loss = jnp.abs(pred.astype(jnp.float32) - tgt.astype(jnp.float32))
        if w is not None:
            loss = loss * w.astype(jnp.float32)
        return loss.astype(out_dtype)

    if has_weight:
        def kernel(pred_ref, tgt_ref, w_ref, out_ref):
            out_ref[...] = _loss(pred_ref[...], tgt_ref[...], w_ref[...],
                                 out_ref.dtype)
    else:
        def kernel(pred_ref, tgt_ref, out_ref):
            out_ref[...] = _loss(pred_ref[...], tgt_ref[...], None,
                                 out_ref.dtype)
    return kernel


# ---------------------------------------------------------------------------
# pallas_call wrappers
# ---------------------------------------------------------------------------

def _tiling(rows):
    tile_rows = TILE_ROWS if rows >= TILE_ROWS else rows
    grid = -(-rows // tile_rows)
    return tile_rows, grid


def _pts_l1_sum(pred2, tgt2, w2):
    """pred2/tgt2[/w2]: (rows, 128) slabs.  Returns scalar f32 sum of the loss."""
    rows = pred2.shape[0]
    tile_rows, grid = _tiling(rows)
    need_mask = (rows % tile_rows) != 0
    has_weight = w2 is not None

    inputs = [pred2, tgt2] + ([w2] if has_weight else [])
    tile_spec = pl.BlockSpec((tile_rows, LANES), lambda i: (i, 0))
    kernel = _make_reduce_kernel(valid_rows=rows, tile_rows=tile_rows,
                                 need_mask=need_mask, has_weight=has_weight)

    n = rows * LANES
    bytes_in = sum(int(a.size) * a.dtype.itemsize for a in inputs)
    cost = pl.CostEstimate(flops=3 * n, transcendentals=0,
                           bytes_accessed=bytes_in + grid * LANES * 4)

    partials = pl.pallas_call(
        kernel,
        out_shape=jax.ShapeDtypeStruct((grid, 1, LANES), jnp.float32),
        grid_spec=pltpu.PrefetchScalarGridSpec(
            num_scalar_prefetch=0,
            grid=(grid,),
            in_specs=[tile_spec] * len(inputs),
            out_specs=pl.BlockSpec((1, 1, LANES), lambda i: (i, 0, 0)),
        ),
        compiler_params=pltpu.CompilerParams(
            dimension_semantics=("parallel",)),
        cost_estimate=cost,
    )(*inputs)

    # Tiny final reduce (grid * 128 f32 values) in plain JAX.
    return jnp.sum(partials)


def _pts_l1_elementwise(pred2, tgt2, w2):
    """Returns (rows, 128) weighted elementwise loss slab."""
    rows = pred2.shape[0]
    tile_rows, grid = _tiling(rows)
    has_weight = w2 is not None

    inputs = [pred2, tgt2] + ([w2] if has_weight else [])
    tile_spec = pl.BlockSpec((tile_rows, LANES), lambda i: (i, 0))
    kernel = _make_elementwise_kernel(has_weight=has_weight)

    n = rows * LANES
    bytes_in = sum(int(a.size) * a.dtype.itemsize for a in inputs)
    cost = pl.CostEstimate(flops=3 * n, transcendentals=0,
                           bytes_accessed=bytes_in + n * pred2.dtype.itemsize)

    return pl.pallas_call(
        kernel,
        out_shape=jax.ShapeDtypeStruct((rows, LANES), pred2.dtype),
        grid_spec=pltpu.PrefetchScalarGridSpec(
            num_scalar_prefetch=0,
            grid=(grid,),
            in_specs=[tile_spec] * len(inputs),
            out_specs=tile_spec,
        ),
        compiler_params=pltpu.CompilerParams(
            dimension_semantics=("parallel",)),
        cost_estimate=cost,
    )(*inputs)


# ---------------------------------------------------------------------------
# Module wrapper (matches mmdet @weighted_loss semantics)
# ---------------------------------------------------------------------------

class PtsL1Loss:
    """JAX/Pallas port of mmdet-style PtsL1Loss (weighted_loss-decorated L1)."""

    def __init__(self, reduction="mean", loss_weight=1.0):
        assert reduction in ("none", "mean", "sum")
        self.reduction = reduction
        self.loss_weight = loss_weight

    def __call__(self, pred, target, weight=None, avg_factor=None,
                 reduction_override=None):
        assert reduction_override in (None, "none", "mean", "sum")
        reduction = reduction_override if reduction_override else self.reduction

        pred = jnp.asarray(pred)
        target = jnp.asarray(target)

        # Keep bf16/f32 streams at their native width (halves HBM bytes for
        # bf16 callers); everything else is upcast to f32.
        if pred.dtype == jnp.float32 or pred.dtype == jnp.bfloat16:
            comp_dtype = pred.dtype
        else:
            comp_dtype = jnp.float32
        pred = pred.astype(comp_dtype)
        target = target.astype(comp_dtype)

        if target.size == 0:
            # matches: return pred.sum() * 0
            return self.loss_weight * (jnp.sum(pred) * 0.0)

        assert pred.shape == target.shape
        orig_shape = pred.shape
        numel = pred.size

        w = None
        if weight is not None:
            w = jnp.broadcast_to(jnp.asarray(weight, comp_dtype), orig_shape)

        # Flatten to a lane-dense (rows, 128) slab; only pad the (<128-element)
        # ragged tail.  Padded pred/target/weight are zeros -> zero contribution.
        n_pad = (-numel) % LANES

        def to2d(x):
            xf = x.reshape(-1)
            if n_pad:
                xf = jnp.pad(xf, (0, n_pad))
            return xf.reshape(-1, LANES)

        pred2 = to2d(pred)
        tgt2 = to2d(target)
        w2 = to2d(w) if w is not None else None

        if reduction == "none":
            loss2 = _pts_l1_elementwise(pred2, tgt2, w2)
            out = loss2.reshape(-1)[:numel].reshape(orig_shape)
        else:
            total = _pts_l1_sum(pred2, tgt2, w2)
            if avg_factor is None:
                if reduction == "mean":
                    # NOTE: mmdet's weighted_loss 'mean' divides by ALL elements
                    # (numel), not by the number of weighted elements.
                    out = total / numel
                else:  # sum
                    out = total
            else:
                if reduction == "mean":
                    out = total / avg_factor
                else:
                    raise ValueError(
                        'avg_factor can not be used with reduction="sum"')

        return self.loss_weight * out


# ---------------------------------------------------------------------------
# Self-test
# ---------------------------------------------------------------------------

if __name__ == "__main__":
    key = jax.random.PRNGKey(0)
    k1, k2, k3, k4, k5, k6 = jax.random.split(key, 6)

    # Small shape consistent with the module: [num_samples, num_pts, num_coords]
    ns, npts, nc = 8, 20, 2
    pred = jax.random.normal(k1, (ns, npts, nc), jnp.float32)
    target = jax.random.normal(k2, (ns, npts, nc), jnp.float32)
    weight = (jax.random.uniform(k3, (ns, npts, nc)) > 0.3).astype(jnp.float32)

    loss_mod = PtsL1Loss(reduction="mean", loss_weight=1.0)

    out_mean = loss_mod(pred, target, weight=weight)                        # weighted mean
    out_sum = loss_mod(pred, target, reduction_override="sum")              # no-weight sum
    out_none = loss_mod(pred, target, weight=weight, reduction_override="none")
    out_avg = loss_mod(pred, target, weight=weight, avg_factor=37.0)

    ref_elem = jnp.abs(pred - target) * weight
    assert jnp.allclose(out_mean, jnp.mean(ref_elem), rtol=1e-5, atol=1e-5)
    assert jnp.allclose(out_sum, jnp.sum(jnp.abs(pred - target)), rtol=1e-5, atol=1e-5)
    assert jnp.allclose(out_none, ref_elem, rtol=1e-5, atol=1e-5)
    assert jnp.allclose(out_avg, jnp.sum(ref_elem) / 37.0, rtol=1e-5, atol=1e-5)

    # Larger shape: exercises multi-block grid + in-kernel tail-row masking
    # (numel = 132000 -> rows = 1032, tile = 1024, grid = 2, 8 valid tail rows).
    ns2, npts2, nc2 = 660, 100, 2
    pred_b = jax.random.normal(k4, (ns2, npts2, nc2), jnp.float32)
    target_b = jax.random.normal(k5, (ns2, npts2, nc2), jnp.float32)
    weight_b = (jax.random.uniform(k6, (ns2, npts2, nc2)) > 0.5).astype(jnp.float32)

    out_mean_b = loss_mod(pred_b, target_b, weight=weight_b)
    out_sum_b = loss_mod(pred_b, target_b, reduction_override="sum")
    out_none_b = loss_mod(pred_b, target_b, weight=weight_b,
                          reduction_override="none")

    jax.block_until_ready((out_mean, out_sum, out_none, out_avg,
                           out_mean_b, out_sum_b, out_none_b))

    ref_b = jnp.abs(pred_b - target_b)
    assert jnp.allclose(out_mean_b, jnp.mean(ref_b * weight_b), rtol=1e-4, atol=1e-5)
    assert jnp.allclose(out_sum_b, jnp.sum(ref_b), rtol=1e-4, atol=1e-3)
    assert jnp.allclose(out_none_b, ref_b * weight_b, rtol=1e-5, atol=1e-5)

    print("KERNEL_OK")
</pallas_src>

<mosaic_0001>
module attributes {stable_mosaic.version = 11 : i64} {
  func.func @kernel(%arg0: i32, %arg1: memref<3x128xf32, #tpu.memory_space<vmem>>, %arg2: memref<3x128xf32, #tpu.memory_space<vmem>>, %arg3: memref<3x128xf32, #tpu.memory_space<vmem>>, %arg4: memref<1x1x128xf32, #tpu.memory_space<vmem>>) attributes {dimension_semantics = [#tpu.dimension_semantics<parallel>], iteration_bounds = array<i64: 1>, scalar_prefetch = 0 : i64, scratch_operands = 0 : i64, tpu.core_type = #tpu.core_type<tc>, window_params = [{transform_indices = @transform_0, window_bounds = array<i64: 3, 128>}, {transform_indices = @transform_1, window_bounds = array<i64: 3, 128>}, {transform_indices = @transform_2, window_bounds = array<i64: 3, 128>}, {transform_indices = @transform_3, window_bounds = array<i64: 1, 1, 128>}]} {
    %c0 = arith.constant 0 : index
    %c0_0 = arith.constant 0 : index
    %0 = vector.load %arg1[%c0, %c0_0] : memref<3x128xf32, #tpu.memory_space<vmem>>, vector<3x128xf32>
    %c0_1 = arith.constant 0 : index
    %c0_2 = arith.constant 0 : index
    %1 = vector.load %arg2[%c0_1, %c0_2] : memref<3x128xf32, #tpu.memory_space<vmem>>, vector<3x128xf32>
    %c0_3 = arith.constant 0 : index
    %c0_4 = arith.constant 0 : index
    %2 = vector.load %arg3[%c0_3, %c0_4] : memref<3x128xf32, #tpu.memory_space<vmem>>, vector<3x128xf32>
    %3 = arith.subf %0, %1 : vector<3x128xf32>
    %4 = math.absf %3 : vector<3x128xf32>
    %5 = arith.mulf %4, %2 : vector<3x128xf32>
    %cst = arith.constant dense<0.000000e+00> : vector<128xf32>
    %6 = vector.multi_reduction <add>, %5, %cst [0] : vector<3x128xf32> to vector<128xf32>
    %7 = vector.shape_cast %6 : vector<128xf32> to vector<1x128xf32>
    %8 = vector.shape_cast %7 : vector<1x128xf32> to vector<1x1x128xf32>
    %c0_5 = arith.constant 0 : index
    %c0_6 = arith.constant 0 : index
    %c0_7 = arith.constant 0 : index
    %9 = vector.load %arg4[%c0_5, %c0_6, %c0_7] : memref<1x1x128xf32, #tpu.memory_space<vmem>>, vector<1x1x128xf32>
    tpu.vector_store %arg4[%c0_5, %c0_6, %c0_7], %8 {strides = array<i32>} : memref<1x1x128xf32, #tpu.memory_space<vmem>>, vector<1x1x128xf32>,
    return
  }
  func.func @transform_0(%arg0: i32) -> (i32, i32) {
    %c0_i32 = arith.constant 0 : i32
    %c0_i32_0 = arith.constant 0 : i32
    return %arg0, %c0_i32 : i32, i32
  }
  func.func @transform_1(%arg0: i32) -> (i32, i32) {
    %c0_i32 = arith.constant 0 : i32
    %c0_i32_0 = arith.constant 0 : i32
    return %arg0, %c0_i32 : i32, i32
  }
  func.func @transform_2(%arg0: i32) -> (i32, i32) {
    %c0_i32 = arith.constant 0 : i32
    %c0_i32_0 = arith.constant 0 : i32
    return %arg0, %c0_i32 : i32, i32
  }
  func.func @transform_3(%arg0: i32) -> (i32, i32, i32) {
    %c0_i32 = arith.constant 0 : i32
    %c0_i32_0 = arith.constant 0 : i32
    %c0_i32_1 = arith.constant 0 : i32
    return %arg0, %c0_i32, %c0_i32_0 : i32, i32, i32
  }
}

</mosaic_0001>

<llo_original>
// kernel: tpu_custom_call.1
$region0: #{tpu_custom_call.1}
  #allocation0 [shape = 'u32[]', space=smem, size = 0x4, offset = 0x4, fixed_abs, tag = 'smem constant byte address 0x4 - core index']
  #allocation1 [shape = 'u32[72,128]{1,0:T(1,128)}', space=vmem, size = 0x9000, scoped, tag = 'internal scratch']
  %s0 = inlined_call_operand.hbm [shape: f32[3,128], index: 0, kind: input, shape index: {}]
  %s1 = inlined_call_operand.hbm [shape: f32[3,128], index: 1, kind: input, shape index: {}]
  %s2 = inlined_call_operand.hbm [shape: f32[3,128], index: 2, kind: input, shape index: {}]
  %s3 = inlined_call_operand.hbm [shape: f32[1,1,128], index: 3, kind: output, shape index: {}]
  %s4 = sld [smem:[#allocation0]]
  $region34: #{tpu_custom_call.1} parent=0
    _
  %s6 = ssub.s32 1, %s4
  %s7 = scalar_select 0, %s6, %s4
  $region1: #{tpu_custom_call.1} parent=0
    #allocation2 [shape = 'u8[2048]{0}', space=vmem, size = 0x800, scoped, tag = 'input window, operand 0, single buffered']
    #allocation3 [shape = 's32[1]{0}', space=sflag, size = 0x4, scoped, tag = 'scoped memory for tpu_custom_call.1']
    #allocation4 [shape = 's32[1]{0}', space=sflag, size = 0x4, scoped, tag = 'scoped memory for tpu_custom_call.1']
    #allocation5 [shape = 'u8[2048]{0}', space=vmem, size = 0x800, scoped, tag = 'input window, operand 1, single buffered']
    #allocation6 [shape = 's32[1]{0}', space=sflag, size = 0x4, scoped, tag = 'scoped memory for tpu_custom_call.1']
    #allocation7 [shape = 'u8[2048]{0}', space=vmem, size = 0x800, scoped, tag = 'input window, operand 2, single buffered']
    #allocation8 [shape = 'u8[512]{0}', space=vmem, size = 0x400, scoped, tag = 'output window, operand 0, single buffered']
    %8 = vsyncpa [#allocation3], 0
    %9 = vsyncpa [#allocation6], 0
    %10 = vsyncpa [#allocation4], 0
    // Predicated region
    $region2: #{tpu_custom_call.1} parent=1 // pred_check
      _
    $region3: #{tpu_custom_call.1} parent=1 // pred_check_branch
      %12 = sbr.rel (0) target = $region5
    $region4: #{tpu_custom_call.1} parent=1 // pred_region
      %14 = vsyncadd [#allocation3], 0
      %s16 = sshll.u32 %s0, 4
      %s17 = int_to_ptr.hbm [resolvable:$true] %s16
      %s18 = sshll.u32 [#allocation2], 4
      %s19 = int_to_ptr.vmem [resolvable:$true] %s18
      %21 = dma.hbm_to_vmem [thread:$0]  %s17, 64, %s19, [#allocation3]
    $region5: #{tpu_custom_call.1} parent=1 // pred_fallthru
      _
    // Predicated region
    $region6: #{tpu_custom_call.1} parent=1 // pred_check
      _
    $region7: #{tpu_custom_call.1} parent=1 // pred_check_branch
      %23 = sbr.rel (0) target = $region9
    $region8: #{tpu_custom_call.1} parent=1 // pred_region
      %25 = vsyncadd [#allocation6], 0
      %s27 = sshll.u32 %s1, 4
      %s28 = int_to_ptr.hbm [resolvable:$true] %s27
      %s29 = sshll.u32 [#allocation5], 4
      %s30 = int_to_ptr.vmem [resolvable:$true] %s29
      %32 = dma.hbm_to_vmem [thread:$0]  %s28, 64, %s30, [#allocation6]
    $region9: #{tpu_custom_call.1} parent=1 // pred_fallthru
      _
    // Predicated region
    $region10: #{tpu_custom_call.1} parent=1 // pred_check
      _
    $region11: #{tpu_custom_call.1} parent=1 // pred_check_branch
      %34 = sbr.rel (0) target = $region13
    $region12: #{tpu_custom_call.1} parent=1 // pred_region
      %36 = vsyncadd [#allocation6], 0
      %s38 = sshll.u32 %s2, 4
      %s39 = int_to_ptr.hbm [resolvable:$true] %s38
      %s40 = sshll.u32 [#allocation7], 4
      %s41 = int_to_ptr.vmem [resolvable:$true] %s40
      %43 = dma.hbm_to_vmem [thread:$0]  %s39, 64, %s41, [#allocation6]
    $region13: #{tpu_custom_call.1} parent=1 // pred_fallthru
      _
    // Predicated region
    $region14: #{tpu_custom_call.1} parent=1 // pred_check
      _
    $region15: #{tpu_custom_call.1} parent=1 // pred_check_branch
      %45 = sbr.rel (0) target = $region17
    $region16: #{tpu_custom_call.1} parent=1 // pred_region
      %47 = dma.done [#allocation3], 64
    $region17: #{tpu_custom_call.1} parent=1 // pred_fallthru
      _
    // Predicated region
    $region18: #{tpu_custom_call.1} parent=1 // pred_check
      _
    $region19: #{tpu_custom_call.1} parent=1 // pred_check_branch
      %49 = sbr.rel (0) target = $region21
    $region20: #{tpu_custom_call.1} parent=1 // pred_region
      %51 = dma.done [#allocation6], 64
    $region21: #{tpu_custom_call.1} parent=1 // pred_fallthru
      _
    // Predicated region
    $region22: #{tpu_custom_call.1} parent=1 // pred_check
      _
    $region23: #{tpu_custom_call.1} parent=1 // pred_check_branch
      %53 = sbr.rel (0) target = $region25
    $region24: #{tpu_custom_call.1} parent=1 // pred_region
      %55 = dma.done [#allocation6], 64
    $region25: #{tpu_custom_call.1} parent=1 // pred_fallthru
      _
    %v56 = vld [vmem:[#allocation2] sm:$0x7]
    %v57 = vld [vmem:[#allocation5] sm:$0x7]
    %v58 = vld [vmem:[#allocation7] sm:$0x7]
    %v59 = vsub.f32 %v56, %v57
    %v60 = vand.u32 2147483647, %v59
    %v61 = vmul.f32 %v60, %v58
    %vm62 = vcmask 1042432
    %v63 = vsel %vm62, %v61, 0.0
    %v64 = vrot.slane %v63, 4
    %v65 = vadd.f32 %v63, %v64
    %v66 = vrot.slane %v65, 2
    %v67 = vadd.f32 %v65, %v66
    %v68 = vrot.slane %v67, 1
    %v69 = vadd.f32 %v67, %v68
    %70 = vst [vmem:[#allocation8] sm:$0x1] %v69
    // Predicated region
    $region26: #{tpu_custom_call.1} parent=1 // pred_check
      _
    $region27: #{tpu_custom_call.1} parent=1 // pred_check_branch
      %72 = sbr.rel (0) target = $region29
    $region28: #{tpu_custom_call.1} parent=1 // pred_region
      %74 = vsyncadd [#allocation4], 0
      %s76 = sshll.u32 [#allocation8], 4
      %s77 = int_to_ptr.vmem [resolvable:$true] %s76
      %s78 = sshll.u32 %s3, 4
      %s79 = int_to_ptr.hbm [resolvable:$true] %s78
      %81 = dma.vmem_to_hbm [thread:$0]  %s77, 16, %s79, [#allocation4]
    $region29: #{tpu_custom_call.1} parent=1 // pred_fallthru
      _
    // Predicated region
    $region30: #{tpu_custom_call.1} parent=1 // pred_check
      _
    $region31: #{tpu_custom_call.1} parent=1 // pred_check_branch
      %83 = sbr.rel (0) target = $region33
    $region32: #{tpu_custom_call.1} parent=1 // pred_region
      %85 = dma.done [#allocation4], 16
    $region33: #{tpu_custom_call.1} parent=1 // pred_fallthru
      _
    %86 = vsyncpa [#allocation3], 1
    %87 = vsyncpa [#allocation6], 1
    %88 = vsyncpa [#allocation4], 1

</llo_original>
